<compile_context>
chip_gen: v5e
topology: v5e:2x2
jax: 0.10.0
libtpu: 0.0.40
codegen_flags: <defaults>
</compile_context>

<pallas_src>
import functools

import jax
import jax.numpy as jnp
from jax.experimental import pallas as pl
from jax.experimental.pallas import tpu as pltpu


_LANE = 128  # lane width / minimum mode tile


def _spectral_kernel(x_ref, w_ref, o_ref):
    # x_ref: (2, B,   Cin,  TM)  packed [real, imag] spectrum, modes on lanes
    # w_ref: (2, Cin, Cout, TM)  packed [real, imag] weights (zero past modes1)
    # o_ref: (2, B,   Cout, TM)  packed [real, imag] output spectrum
    xr = x_ref[0]          # (B, Cin, TM)
    xi = x_ref[1]
    wr = w_ref[0]          # (Cin, Cout, TM)
    wi = w_ref[1]
    cin = wr.shape[0]

    # Contract over Cin on the VPU; modes stay lane-dense.  Accumulate in f32
    # and store once per re/im plane (two lane-dense stores per grid step).
    def term(i):
        a = xr[:, i, None, :]          # (B, 1, TM)
        b = xi[:, i, None, :]
        c = wr[i][None, :, :]          # (1, Cout, TM)
        d = wi[i][None, :, :]
        return a * c - b * d, a * d + b * c

    acc_r, acc_i = term(0)
    for i in range(1, cin):            # static unroll; Cin is small & static
        tr, ti = term(i)
        acc_r = acc_r + tr
        acc_i = acc_i + ti

    o_ref[0] = acc_r
    o_ref[1] = acc_i


def _pick_tile(mpad, per_mode_bytes, vmem_budget=8 << 20):
    """Largest multiple-of-128 divisor of mpad whose (double-buffered)
    VMEM footprint stays under budget."""
    tm = mpad
    while tm > _LANE:
        if mpad % tm == 0 and 2 * tm * per_mode_bytes <= vmem_budget:
            return tm
        tm -= _LANE
    return _LANE


def spectral_conv1d(x, w_re, w_im, modes1):
    """x: (B, Cin, N) float32; w_re/w_im: (Cin, Cout, modes1) float32."""
    B, Cin, N = x.shape
    Cout = w_re.shape[1]
    K = N // 2 + 1
    M = min(modes1, K)
    Mpad = ((M + _LANE - 1) // _LANE) * _LANE

    # bytes per mode (lane) across x, w and out blocks (f32, re+im)
    per_mode_bytes = 4 * 2 * (B * Cin + Cin * Cout + B * Cout)
    TM = _pick_tile(Mpad, per_mode_bytes)
    grid = (Mpad // TM,)

    # rfft along last dim (plain-JAX glue); keep only the modes we use,
    # pack re/im, pad modes to the lane tile.
    x_ft = jnp.fft.rfft(x, axis=-1)[:, :, :M]                      # (B, Cin, M)
    x_packed = jnp.stack(
        [jnp.real(x_ft), jnp.imag(x_ft)], axis=0).astype(jnp.float32)
    x_packed = jnp.pad(x_packed, ((0, 0), (0, 0), (0, 0), (0, Mpad - M)))

    # Weights zero-padded to the lane tile: padded modes multiply to zero.
    w_packed = jnp.stack(
        [w_re[:, :, :M], w_im[:, :, :M]], axis=0).astype(jnp.float32)
    w_packed = jnp.pad(w_packed, ((0, 0), (0, 0), (0, 0), (0, Mpad - M)))

    out_packed = pl.pallas_call(
        _spectral_kernel,
        grid=grid,
        in_specs=[
            pl.BlockSpec((2, B, Cin, TM), lambda t: (0, 0, 0, t)),
            pl.BlockSpec((2, Cin, Cout, TM), lambda t: (0, 0, 0, t)),
        ],
        out_specs=pl.BlockSpec((2, B, Cout, TM), lambda t: (0, 0, 0, t)),
        out_shape=jax.ShapeDtypeStruct((2, B, Cout, Mpad), jnp.float32),
        compiler_params=pltpu.CompilerParams(
            dimension_semantics=("parallel",)),
    )(x_packed, w_packed)

    # Reassemble complex spectrum, zero-pad modes >= modes1, inverse rfft.
    out_ft = (out_packed[0, :, :, :M]
              + 1j * out_packed[1, :, :, :M]).astype(jnp.complex64)  # (B,Cout,M)
    out_ft = jnp.pad(out_ft, ((0, 0), (0, 0), (0, K - M)))           # (B,Cout,K)
    return jnp.fft.irfft(out_ft, n=N, axis=-1).astype(jnp.float32)   # (B,Cout,N)


def _reference(x, w_re, w_im, modes1):
    # Pure-JAX reference mirroring the PyTorch forward.
    B, Cin, N = x.shape
    Cout = w_re.shape[1]
    w = (w_re + 1j * w_im).astype(jnp.complex64)
    x_ft = jnp.fft.rfft(x, axis=-1)
    out_m = jnp.einsum('bix,iox->box', x_ft[:, :, :modes1], w)
    out_ft = jnp.zeros((B, Cout, N // 2 + 1), dtype=jnp.complex64)
    out_ft = out_ft.at[:, :, :modes1].set(out_m)
    return jnp.fft.irfft(out_ft, n=N, axis=-1)


if __name__ == "__main__":
    # Small shapes consistent with the module's forward.
    B, Cin, Cout, N, modes1 = 2, 4, 4, 16, 8

    key = jax.random.PRNGKey(0)
    kx, kwr, kwi = jax.random.split(key, 3)

    x = jax.random.normal(kx, (B, Cin, N), dtype=jnp.float32)

    # Deterministic parameter init: scale * U[0,1) for real and imag parts
    # (matches scale * torch.rand(..., dtype=cfloat) in spirit).
    scale = 1.0 / (Cin * Cout)
    w_re = scale * jax.random.uniform(kwr, (Cin, Cout, modes1), dtype=jnp.float32)
    w_im = scale * jax.random.uniform(kwi, (Cin, Cout, modes1), dtype=jnp.float32)

    fn = jax.jit(functools.partial(spectral_conv1d, modes1=modes1))
    out = fn(x, w_re, w_im)
    out = jax.block_until_ready(out)

    ref = _reference(x, w_re, w_im, modes1)
    assert out.shape == (B, Cout, N)
    assert jnp.allclose(out, ref, atol=1e-5, rtol=1e-5)

    print("KERNEL_OK")
</pallas_src>

<mosaic_0001>
module attributes {stable_mosaic.version = 11 : i64} {
  func.func @_spectral_kernel(%arg0: i32, %arg1: memref<2x2x4x128xf32, #tpu.memory_space<vmem>>, %arg2: memref<2x4x4x128xf32, #tpu.memory_space<vmem>>, %arg3: memref<2x2x4x128xf32, #tpu.memory_space<vmem>>) attributes {dimension_semantics = [#tpu.dimension_semantics<parallel>], iteration_bounds = array<i64: 1>, scalar_prefetch = 0 : i64, scratch_operands = 0 : i64, tpu.core_type = #tpu.core_type<tc>, window_params = [{transform_indices = @transform_0, window_bounds = array<i64: 2, 2, 4, 128>}, {transform_indices = @transform_1, window_bounds = array<i64: 2, 4, 4, 128>}, {transform_indices = @transform_2, window_bounds = array<i64: 2, 2, 4, 128>}]} {
    %c0 = arith.constant 0 : index
    %c0_0 = arith.constant 0 : index
    %c0_1 = arith.constant 0 : index
    %c0_2 = arith.constant 0 : index
    %0 = vector.load %arg1[%c0, %c0_0, %c0_1, %c0_2] : memref<2x2x4x128xf32, #tpu.memory_space<vmem>>, vector<1x2x4x128xf32>
    %1 = vector.shape_cast %0 : vector<1x2x4x128xf32> to vector<2x4x128xf32>
    %c1 = arith.constant 1 : index
    %c0_3 = arith.constant 0 : index
    %c0_4 = arith.constant 0 : index
    %c0_5 = arith.constant 0 : index
    %2 = vector.load %arg1[%c1, %c0_3, %c0_4, %c0_5] : memref<2x2x4x128xf32, #tpu.memory_space<vmem>>, vector<1x2x4x128xf32>
    %3 = vector.shape_cast %2 : vector<1x2x4x128xf32> to vector<2x4x128xf32>
    %c0_6 = arith.constant 0 : index
    %c0_7 = arith.constant 0 : index
    %c0_8 = arith.constant 0 : index
    %c0_9 = arith.constant 0 : index
    %4 = vector.load %arg2[%c0_6, %c0_7, %c0_8, %c0_9] : memref<2x4x4x128xf32, #tpu.memory_space<vmem>>, vector<1x4x4x128xf32>
    %5 = vector.shape_cast %4 : vector<1x4x4x128xf32> to vector<4x4x128xf32>
    %c1_10 = arith.constant 1 : index
    %c0_11 = arith.constant 0 : index
    %c0_12 = arith.constant 0 : index
    %c0_13 = arith.constant 0 : index
    %6 = vector.load %arg2[%c1_10, %c0_11, %c0_12, %c0_13] : memref<2x4x4x128xf32, #tpu.memory_space<vmem>>, vector<1x4x4x128xf32>
    %7 = vector.shape_cast %6 : vector<1x4x4x128xf32> to vector<4x4x128xf32>
    %8 = vector.extract_strided_slice %1 {offsets = [0, 0, 0], sizes = [2, 1, 128], strides = [1, 1, 1]} : vector<2x4x128xf32> to vector<2x1x128xf32>
    %9 = vector.shape_cast %8 : vector<2x1x128xf32> to vector<2x128xf32>
    %10 = vector.shape_cast %9 : vector<2x128xf32> to vector<2x1x128xf32>
    %11 = vector.extract_strided_slice %3 {offsets = [0, 0, 0], sizes = [2, 1, 128], strides = [1, 1, 1]} : vector<2x4x128xf32> to vector<2x1x128xf32>
    %12 = vector.shape_cast %11 : vector<2x1x128xf32> to vector<2x128xf32>
    %13 = vector.shape_cast %12 : vector<2x128xf32> to vector<2x1x128xf32>
    %14 = vector.extract_strided_slice %5 {offsets = [0, 0, 0], sizes = [1, 4, 128], strides = [1, 1, 1]} : vector<4x4x128xf32> to vector<1x4x128xf32>
    %15 = vector.shape_cast %14 : vector<1x4x128xf32> to vector<4x128xf32>
    %16 = vector.shape_cast %15 : vector<4x128xf32> to vector<1x4x128xf32>
    %17 = vector.extract_strided_slice %7 {offsets = [0, 0, 0], sizes = [1, 4, 128], strides = [1, 1, 1]} : vector<4x4x128xf32> to vector<1x4x128xf32>
    %18 = vector.shape_cast %17 : vector<1x4x128xf32> to vector<4x128xf32>
    %19 = vector.shape_cast %18 : vector<4x128xf32> to vector<1x4x128xf32>
    %20 = vector.broadcast %10 : vector<2x1x128xf32> to vector<2x4x128xf32>
    %21 = vector.broadcast %16 : vector<1x4x128xf32> to vector<2x4x128xf32>
    %22 = arith.mulf %20, %21 : vector<2x4x128xf32>
    %23 = vector.broadcast %13 : vector<2x1x128xf32> to vector<2x4x128xf32>
    %24 = vector.broadcast %19 : vector<1x4x128xf32> to vector<2x4x128xf32>
    %25 = arith.mulf %23, %24 : vector<2x4x128xf32>
    %26 = arith.subf %22, %25 : vector<2x4x128xf32>
    %27 = vector.broadcast %10 : vector<2x1x128xf32> to vector<2x4x128xf32>
    %28 = vector.broadcast %19 : vector<1x4x128xf32> to vector<2x4x128xf32>
    %29 = arith.mulf %27, %28 : vector<2x4x128xf32>
    %30 = vector.broadcast %13 : vector<2x1x128xf32> to vector<2x4x128xf32>
    %31 = vector.broadcast %16 : vector<1x4x128xf32> to vector<2x4x128xf32>
    %32 = arith.mulf %30, %31 : vector<2x4x128xf32>
    %33 = arith.addf %29, %32 : vector<2x4x128xf32>
    %34 = vector.extract_strided_slice %1 {offsets = [0, 1, 0], sizes = [2, 1, 128], strides = [1, 1, 1]} : vector<2x4x128xf32> to vector<2x1x128xf32>
    %35 = vector.shape_cast %34 : vector<2x1x128xf32> to vector<2x128xf32>
    %36 = vector.shape_cast %35 : vector<2x128xf32> to vector<2x1x128xf32>
    %37 = vector.extract_strided_slice %3 {offsets = [0, 1, 0], sizes = [2, 1, 128], strides = [1, 1, 1]} : vector<2x4x128xf32> to vector<2x1x128xf32>
    %38 = vector.shape_cast %37 : vector<2x1x128xf32> to vector<2x128xf32>
    %39 = vector.shape_cast %38 : vector<2x128xf32> to vector<2x1x128xf32>
    %40 = vector.extract_strided_slice %5 {offsets = [1, 0, 0], sizes = [1, 4, 128], strides = [1, 1, 1]} : vector<4x4x128xf32> to vector<1x4x128xf32>
    %41 = vector.shape_cast %40 : vector<1x4x128xf32> to vector<4x128xf32>
    %42 = vector.shape_cast %41 : vector<4x128xf32> to vector<1x4x128xf32>
    %43 = vector.extract_strided_slice %7 {offsets = [1, 0, 0], sizes = [1, 4, 128], strides = [1, 1, 1]} : vector<4x4x128xf32> to vector<1x4x128xf32>
    %44 = vector.shape_cast %43 : vector<1x4x128xf32> to vector<4x128xf32>
    %45 = vector.shape_cast %44 : vector<4x128xf32> to vector<1x4x128xf32>
    %46 = vector.broadcast %36 : vector<2x1x128xf32> to vector<2x4x128xf32>
    %47 = vector.broadcast %42 : vector<1x4x128xf32> to vector<2x4x128xf32>
    %48 = arith.mulf %46, %47 : vector<2x4x128xf32>
    %49 = vector.broadcast %39 : vector<2x1x128xf32> to vector<2x4x128xf32>
    %50 = vector.broadcast %45 : vector<1x4x128xf32> to vector<2x4x128xf32>
    %51 = arith.mulf %49, %50 : vector<2x4x128xf32>
    %52 = arith.subf %48, %51 : vector<2x4x128xf32>
    %53 = vector.broadcast %36 : vector<2x1x128xf32> to vector<2x4x128xf32>
    %54 = vector.broadcast %45 : vector<1x4x128xf32> to vector<2x4x128xf32>
    %55 = arith.mulf %53, %54 : vector<2x4x128xf32>
    %56 = vector.broadcast %39 : vector<2x1x128xf32> to vector<2x4x128xf32>
    %57 = vector.broadcast %42 : vector<1x4x128xf32> to vector<2x4x128xf32>
    %58 = arith.mulf %56, %57 : vector<2x4x128xf32>
    %59 = arith.addf %55, %58 : vector<2x4x128xf32>
    %60 = arith.addf %26, %52 : vector<2x4x128xf32>
    %61 = arith.addf %33, %59 : vector<2x4x128xf32>
    %62 = vector.extract_strided_slice %1 {offsets = [0, 2, 0], sizes = [2, 1, 128], strides = [1, 1, 1]} : vector<2x4x128xf32> to vector<2x1x128xf32>
    %63 = vector.shape_cast %62 : vector<2x1x128xf32> to vector<2x128xf32>
    %64 = vector.shape_cast %63 : vector<2x128xf32> to vector<2x1x128xf32>
    %65 = vector.extract_strided_slice %3 {offsets = [0, 2, 0], sizes = [2, 1, 128], strides = [1, 1, 1]} : vector<2x4x128xf32> to vector<2x1x128xf32>
    %66 = vector.shape_cast %65 : vector<2x1x128xf32> to vector<2x128xf32>
    %67 = vector.shape_cast %66 : vector<2x128xf32> to vector<2x1x128xf32>
    %68 = vector.extract_strided_slice %5 {offsets = [2, 0, 0], sizes = [1, 4, 128], strides = [1, 1, 1]} : vector<4x4x128xf32> to vector<1x4x128xf32>
    %69 = vector.shape_cast %68 : vector<1x4x128xf32> to vector<4x128xf32>
    %70 = vector.shape_cast %69 : vector<4x128xf32> to vector<1x4x128xf32>
    %71 = vector.extract_strided_slice %7 {offsets = [2, 0, 0], sizes = [1, 4, 128], strides = [1, 1, 1]} : vector<4x4x128xf32> to vector<1x4x128xf32>
    %72 = vector.shape_cast %71 : vector<1x4x128xf32> to vector<4x128xf32>
    %73 = vector.shape_cast %72 : vector<4x128xf32> to vector<1x4x128xf32>
    %74 = vector.broadcast %64 : vector<2x1x128xf32> to vector<2x4x128xf32>
    %75 = vector.broadcast %70 : vector<1x4x128xf32> to vector<2x4x128xf32>
    %76 = arith.mulf %74, %75 : vector<2x4x128xf32>
    %77 = vector.broadcast %67 : vector<2x1x128xf32> to vector<2x4x128xf32>
    %78 = vector.broadcast %73 : vector<1x4x128xf32> to vector<2x4x128xf32>
    %79 = arith.mulf %77, %78 : vector<2x4x128xf32>
    %80 = arith.subf %76, %79 : vector<2x4x128xf32>
    %81 = vector.broadcast %64 : vector<2x1x128xf32> to vector<2x4x128xf32>
    %82 = vector.broadcast %73 : vector<1x4x128xf32> to vector<2x4x128xf32>
    %83 = arith.mulf %81, %82 : vector<2x4x128xf32>
    %84 = vector.broadcast %67 : vector<2x1x128xf32> to vector<2x4x128xf32>
    %85 = vector.broadcast %70 : vector<1x4x128xf32> to vector<2x4x128xf32>
    %86 = arith.mulf %84, %85 : vector<2x4x128xf32>
    %87 = arith.addf %83, %86 : vector<2x4x128xf32>
    %88 = arith.addf %60, %80 : vector<2x4x128xf32>
    %89 = arith.addf %61, %87 : vector<2x4x128xf32>
    %90 = vector.extract_strided_slice %1 {offsets = [0, 3, 0], sizes = [2, 1, 128], strides = [1, 1, 1]} : vector<2x4x128xf32> to vector<2x1x128xf32>
    %91 = vector.shape_cast %90 : vector<2x1x128xf32> to vector<2x128xf32>
    %92 = vector.shape_cast %91 : vector<2x128xf32> to vector<2x1x128xf32>
    %93 = vector.extract_strided_slice %3 {offsets = [0, 3, 0], sizes = [2, 1, 128], strides = [1, 1, 1]} : vector<2x4x128xf32> to vector<2x1x128xf32>
    %94 = vector.shape_cast %93 : vector<2x1x128xf32> to vector<2x128xf32>
    %95 = vector.shape_cast %94 : vector<2x128xf32> to vector<2x1x128xf32>
    %96 = vector.extract_strided_slice %5 {offsets = [3, 0, 0], sizes = [1, 4, 128], strides = [1, 1, 1]} : vector<4x4x128xf32> to vector<1x4x128xf32>
    %97 = vector.shape_cast %96 : vector<1x4x128xf32> to vector<4x128xf32>
    %98 = vector.shape_cast %97 : vector<4x128xf32> to vector<1x4x128xf32>
    %99 = vector.extract_strided_slice %7 {offsets = [3, 0, 0], sizes = [1, 4, 128], strides = [1, 1, 1]} : vector<4x4x128xf32> to vector<1x4x128xf32>
    %100 = vector.shape_cast %99 : vector<1x4x128xf32> to vector<4x128xf32>
    %101 = vector.shape_cast %100 : vector<4x128xf32> to vector<1x4x128xf32>
    %102 = vector.broadcast %92 : vector<2x1x128xf32> to vector<2x4x128xf32>
    %103 = vector.broadcast %98 : vector<1x4x128xf32> to vector<2x4x128xf32>
    %104 = arith.mulf %102, %103 : vector<2x4x128xf32>
    %105 = vector.broadcast %95 : vector<2x1x128xf32> to vector<2x4x128xf32>
    %106 = vector.broadcast %101 : vector<1x4x128xf32> to vector<2x4x128xf32>
    %107 = arith.mulf %105, %106 : vector<2x4x128xf32>
    %108 = arith.subf %104, %107 : vector<2x4x128xf32>
    %109 = vector.broadcast %92 : vector<2x1x128xf32> to vector<2x4x128xf32>
    %110 = vector.broadcast %101 : vector<1x4x128xf32> to vector<2x4x128xf32>
    %111 = arith.mulf %109, %110 : vector<2x4x128xf32>
    %112 = vector.broadcast %95 : vector<2x1x128xf32> to vector<2x4x128xf32>
    %113 = vector.broadcast %98 : vector<1x4x128xf32> to vector<2x4x128xf32>
    %114 = arith.mulf %112, %113 : vector<2x4x128xf32>
    %115 = arith.addf %111, %114 : vector<2x4x128xf32>
    %116 = arith.addf %88, %108 : vector<2x4x128xf32>
    %117 = arith.addf %89, %115 : vector<2x4x128xf32>
    %c0_14 = arith.constant 0 : index
    %c0_15 = arith.constant 0 : index
    %c0_16 = arith.constant 0 : index
    %c0_17 = arith.constant 0 : index
    %118 = vector.load %arg3[%c0_14, %c0_15, %c0_16, %c0_17] : memref<2x2x4x128xf32, #tpu.memory_space<vmem>>, vector<1x2x4x128xf32>
    %119 = vector.shape_cast %118 : vector<1x2x4x128xf32> to vector<2x4x128xf32>
    %120 = vector.shape_cast %116 : vector<2x4x128xf32> to vector<1x2x4x128xf32>
    tpu.vector_store %arg3[%c0_14, %c0_15, %c0_16, %c0_17], %120 {strides = array<i32>} : memref<2x2x4x128xf32, #tpu.memory_space<vmem>>, vector<1x2x4x128xf32>,
    %c1_18 = arith.constant 1 : index
    %c0_19 = arith.constant 0 : index
    %c0_20 = arith.constant 0 : index
    %c0_21 = arith.constant 0 : index
    %121 = vector.load %arg3[%c1_18, %c0_19, %c0_20, %c0_21] : memref<2x2x4x128xf32, #tpu.memory_space<vmem>>, vector<1x2x4x128xf32>
    %122 = vector.shape_cast %121 : vector<1x2x4x128xf32> to vector<2x4x128xf32>
    %123 = vector.shape_cast %117 : vector<2x4x128xf32> to vector<1x2x4x128xf32>
    tpu.vector_store %arg3[%c1_18, %c0_19, %c0_20, %c0_21], %123 {strides = array<i32>} : memref<2x2x4x128xf32, #tpu.memory_space<vmem>>, vector<1x2x4x128xf32>,
    return
  }
  func.func @transform_0(%arg0: i32) -> (i32, i32, i32, i32) {
    %c0_i32 = arith.constant 0 : i32
    %c0_i32_0 = arith.constant 0 : i32
    %c0_i32_1 = arith.constant 0 : i32
    %c0_i32_2 = arith.constant 0 : i32
    return %c0_i32, %c0_i32_0, %c0_i32_1, %arg0 : i32, i32, i32, i32
  }
  func.func @transform_1(%arg0: i32) -> (i32, i32, i32, i32) {
    %c0_i32 = arith.constant 0 : i32
    %c0_i32_0 = arith.constant 0 : i32
    %c0_i32_1 = arith.constant 0 : i32
    %c0_i32_2 = arith.constant 0 : i32
    return %c0_i32, %c0_i32_0, %c0_i32_1, %arg0 : i32, i32, i32, i32
  }
  func.func @transform_2(%arg0: i32) -> (i32, i32, i32, i32) {
    %c0_i32 = arith.constant 0 : i32
    %c0_i32_0 = arith.constant 0 : i32
    %c0_i32_1 = arith.constant 0 : i32
    %c0_i32_2 = arith.constant 0 : i32
    return %c0_i32, %c0_i32_0, %c0_i32_1, %arg0 : i32, i32, i32, i32
  }
}

</mosaic_0001>

<llo_original>
// kernel: reverse.1
$region0: #{reverse.1}
  %s0 = inlined_call_operand.vmem [shape: f32[2,4,7], index: 0, kind: input, shape index: {}]
  %s1 = inlined_call_operand.vmem [shape: f32[2,4,7], index: 1, kind: output, shape index: {}]
  %v2 = vlaneseq
  %v3 = vsub.s32 6, %v2
  %4 = vset.pattern.permute.xlu0 %v3
  $region1: #{reverse.1} parent=0
    #allocation0 [shape = 'u8[8192]{0}', space=vmem, size = 0x2000, scoped, tag = 'operand span for operand 0']
    #allocation1 [shape = 'u8[4096]{0}', space=vmem, size = 0x1000, scoped, tag = 'packed  for operand 0']
    #allocation2 [shape = 'u8[8192]{0}', space=vmem, size = 0x2000, scoped, tag = 'operand span for operand 1']
    #allocation3 [shape = 'u8[4096]{0}', space=vmem, size = 0x1000, scoped, tag = 'packed  for operand 1']
    // Predicated region
    $region2: #{reverse.1} parent=1 // pred_check
      _
    $region3: #{reverse.1} parent=1 // pred_check_branch
      %6 = sbr.rel (0) target = $region5
    $region4: #{reverse.1} parent=1 // pred_region
      // Predicated region
      $region6: #{reverse.1} parent=4 // pred_check
        _
      $region7: #{reverse.1} parent=4 // pred_check_branch
        %8 = sbr.rel target = $region9
      $region8: #{reverse.1} parent=4 // pred_region
        // Predicated region
        $region21: #{reverse.1} parent=8 // pred_check
          _
        $region22: #{reverse.1} parent=8 // pred_check_branch
          %26 = sbr.rel (0) target = $region24
        $region23: #{reverse.1} parent=8 // pred_region
          loop: start=0, step=1, limit=1
          $region25: #{reverse.1} parent=23 // loop_pre_header
            _
          $region26: #{reverse.1} parent=23 // loop_header
            %s28 = sphi 0, %s32
            %p29 = scmp.ge.s32.totalorder %s28, 1
            %s33 = sphi %s0, %s0
            %s34 = sphi [#allocation1], [#allocation1]
          $region27: #{reverse.1} parent=23 // loop_header_branch
            %31 = sbr.rel (%p29) target = $region31
          $region28: #{reverse.1} parent=23 // loop_body
            _
          $region29: #{reverse.1} parent=23 // loop_footer
            %s32 = sadd.s32 1, %s28
          $region30: #{reverse.1} parent=23 // loop_footer_branch
            %27 = sbr.rel target = $region26
          $region31: #{reverse.1} parent=23 // loop_exit
            _
          %s36 = ssub.s32 16, 1
          loop: start=0, step=1, limit=1
          $region32: #{reverse.1} parent=23 // loop_pre_header
            _
          $region33: #{reverse.1} parent=23 // loop_header
            %s38 = sphi 0, %s42
            %p39 = scmp.ge.s32.totalorder %s38, 1
            %s43 = sphi %s0, %s0
            %s44 = sphi [#allocation1], [#allocation1]
          $region34: #{reverse.1} parent=23 // loop_header_branch
            %41 = sbr.rel (%p39) target = $region38
          $region35: #{reverse.1} parent=23 // loop_body
            %v45 = vld [vmem:[%s43] sm:%s36]
            %46 = vst [vmem:[%s44] sm:%s36] %v45
            %v47 = vld [vmem:[%s43 + $0x4] sm:%s36]
            %48 = vst [vmem:[%s44 + $0x4] sm:%s36] %v47
          $region36: #{reverse.1} parent=23 // loop_footer
            %s42 = sadd.s32 1, %s38
          $region37: #{reverse.1} parent=23 // loop_footer_branch
            %37 = sbr.rel target = $region33
          $region38: #{reverse.1} parent=23 // loop_exit
            _
        $region24: #{reverse.1} parent=8 // pred_fallthru
          _
      $region9: #{reverse.1} parent=4 // pred_fallthru
        _
      // Predicated region
      $region10: #{reverse.1} parent=4 // pred_check
        _
      $region11: #{reverse.1} parent=4 // pred_check_branch
        %10 = sbr.rel (0) target = $region13
      $region12: #{reverse.1} parent=4 // pred_region
        %s12 = ssub.s32 16, 1
        loop: start=0, step=1, limit=1
        $region14: #{reverse.1} parent=12 // loop_pre_header
          _
        $region15: #{reverse.1} parent=12 // loop_header
          %s14 = sphi 0, %s18
          %p15 = scmp.ge.s32.totalorder %s14, 1
          %s19 = sphi %s0, %s0
          %s20 = sphi [#allocation1], [#allocation1]
        $region16: #{reverse.1} parent=12 // loop_header_branch
          %17 = sbr.rel (%p15) target = $region20
        $region17: #{reverse.1} parent=12 // loop_body
          %v21 = vld [vmem:[%s19] sm:%s12]
          %22 = vst [vmem:[%s20] sm:%s12] %v21
          %v23 = vld [vmem:[%s19 + $0x4] sm:%s12]
          %24 = vst [vmem:[%s20 + $0x4] sm:%s12] %v23
        $region18: #{reverse.1} parent=12 // loop_footer
          %s18 = sadd.s32 1, %s14
        $region19: #{reverse.1} parent=12 // loop_footer_branch
          %13 = sbr.rel target = $region15
        $region20: #{reverse.1} parent=12 // loop_exit
          _
      $region13: #{reverse.1} parent=4 // pred_fallthru
        _
    $region5: #{reverse.1} parent=1 // pred_fallthru
      _
    %49 = vnop
    %s51 = ssub.s32 16, 1
    %s52 = scalar_lea.vmem [#allocation1], 4
    %v53 = vld [vmem:[%s52] sm:%s51]
    %s54 = scalar_lea.vmem [#allocation0], 8
    %55 = vst [vmem:[%s54] sm:%s51] %v53
    %v56 = vld [vmem:[#allocation1] sm:%s51]
    %57 = vst [vmem:[#allocation0] sm:%s51] %v56
    %v58 = vld [vmem:[#allocation0] sm:$0xff]
    %59 = vperm.xlu0 %4, %v58
    %v60 = vpop.permute.xlu0 %59
    %61 = vst [vmem:[#allocation2] sm:$0xff] %v60
    %s62 = scalar_lea.vmem [#allocation2], 8
    %s63 = scalar_lea.vmem [#allocation0], 8
    %v64 = vld [vmem:[%s63] sm:$0xff]
    %65 = vperm.xlu0 %4, %v64
    %v66 = vpop.permute.xlu0 %65
    %67 = vst [vmem:[%s62] sm:$0xff] %v66
    %s69 = ssub.s32 16, 1
    %v70 = vld [vmem:[#allocation2] sm:%s69]
    %s72 = ssub.s32 16, 1
    %73 = vst [vmem:[#allocation3] sm:%s72] %v70
    %s74 = scalar_lea.vmem [#allocation2], 8
    %v75 = vld [vmem:[%s74] sm:%s69]
    %s77 = ssub.s32 16, 1
    %s78 = scalar_lea.vmem [#allocation3], 4
    %79 = vst [vmem:[%s78] sm:%s77] %v75
    // Predicated region
    $region39: #{reverse.1} parent=1 // pred_check
      _
    $region40: #{reverse.1} parent=1 // pred_check_branch
      %81 = sbr.rel (0) target = $region42
    $region41: #{reverse.1} parent=1 // pred_region
      // Predicated region
      $region43: #{reverse.1} parent=41 // pred_check
        _
      $region44: #{reverse.1} parent=41 // pred_check_branch
        %83 = sbr.rel target = $region46
      $region45: #{reverse.1} parent=41 // pred_region
        // Predicated region
        $region58: #{reverse.1} parent=45 // pred_check
          _
        $region59: #{reverse.1} parent=45 // pred_check_branch
          %101 = sbr.rel (0) target = $region61
        $region60: #{reverse.1} parent=45 // pred_region
          loop: start=0, step=1, limit=1
          $region62: #{reverse.1} parent=60 // loop_pre_header
            _
          $region63: #{reverse.1} parent=60 // loop_header
            %s103 = sphi 0, %s107
            %p104 = scmp.ge.s32.totalorder %s103, 1
            %s108 = sphi [#allocation3], [#allocation3]
            %s109 = sphi %s1, %s1
          $region64: #{reverse.1} parent=60 // loop_header_branch
            %106 = sbr.rel (%p104) target = $region68
          $region65: #{reverse.1} parent=60 // loop_body
            _
          $region66: #{reverse.1} parent=60 // loop_footer
            %s107 = sadd.s32 1, %s103
          $region67: #{reverse.1} parent=60 // loop_footer_branch
            %102 = sbr.rel target = $region63
          $region68: #{reverse.1} parent=60 // loop_exit
            _
          %s111 = ssub.s32 16, 1
          loop: start=0, step=1, limit=1
          $region69: #{reverse.1} parent=60 // loop_pre_header
            _
          $region70: #{reverse.1} parent=60 // loop_header
            %s113 = sphi 0, %s117
            %p114 = scmp.ge.s32.totalorder %s113, 1
            %s118 = sphi [#allocation3], [#allocation3]
            %s119 = sphi %s1, %s1
          $region71: #{reverse.1} parent=60 // loop_header_branch
            %116 = sbr.rel (%p114) target = $region75
          $region72: #{reverse.1} parent=60 // loop_body
            %v120 = vld [vmem:[%s118] sm:%s111]
            %121 = vst [vmem:[%s119] sm:%s111] %v120
            %v122 = vld [vmem:[%s118 + $0x4] sm:%s111]
            %123 = vst [vmem:[%s119 + $0x4] sm:%s111] %v122
          $region73: #{reverse.1} parent=60 // loop_footer
            %s117 = sadd.s32 1, %s113
          $region74: #{reverse.1} parent=60 // loop_footer_branch
            %112 = sbr.rel target = $region70
          $region75: #{reverse.1} parent=60 // loop_exit
            _
        $region61: #{reverse.1} parent=45 // pred_fallthru
          _
      $region46: #{reverse.1} parent=41 // pred_fallthru
        _
      // Predicated region
      $region47: #{reverse.1} parent=41 // pred_check
        _
      $region48: #{reverse.1} parent=41 // pred_check_branch
        %85 = sbr.rel (0) target = $region50
      $region49: #{reverse.1} parent=41 // pred_region
        %s87 = ssub.s32 16, 1
        loop: start=0, step=1, limit=1
        $region51: #{reverse.1} parent=49 // loop_pre_header
          _
        $region52: #{reverse.1} parent=49 // loop_header
          %s89 = sphi 0, %s93
          %p90 = scmp.ge.s32.totalorder %s89, 1
          %s94 = sphi [#allocation3], [#allocation3]
          %s95 = sphi %s1, %s1
        $region53: #{reverse.1} parent=49 // loop_header_branch
          %92 = sbr.rel (%p90) target = $region57
        $region54: #{reverse.1} parent=49 // loop_body
          %v96 = vld [vmem:[%s94] sm:%s87]
          %97 = vst [vmem:[%s95] sm:%s87] %v96
          %v98 = vld [vmem:[%s94 + $0x4] sm:%s87]
          %99 = vst [vmem:[%s95 + $0x4] sm:%s87] %v98
        $region55: #{reverse.1} parent=49 // loop_footer
          %s93 = sadd.s32 1, %s89
        $region56: #{reverse.1} parent=49 // loop_footer_branch
          %88 = sbr.rel target = $region52
        $region57: #{reverse.1} parent=49 // loop_exit
          _
      $region50: #{reverse.1} parent=41 // pred_fallthru
        _
    $region42: #{reverse.1} parent=1 // pred_fallthru
      _
    %124 = vnop

// kernel: spectral_conv1d.1
$region0: #{spectral_conv1d.1}
  #allocation0 [shape = 'u32[]', space=smem, size = 0x4, offset = 0x4, fixed_abs, tag = 'smem constant byte address 0x4 - core index']
  #allocation1 [shape = 'u32[72,128]{1,0:T(1,128)}', space=vmem, size = 0x9000, scoped, tag = 'internal scratch']
  %s0 = inlined_call_operand.vmem [shape: f32[2,2,4,128], index: 0, kind: input, shape index: {}]
  %s1 = inlined_call_operand.vmem [shape: f32[2,4,4,128], index: 1, kind: input, shape index: {}]
  %s2 = inlined_call_operand.vmem [shape: f32[2,2,4,128], index: 2, kind: output, shape index: {}]
  %s3 = sld [smem:[#allocation0]]
  $region18: #{spectral_conv1d.1} parent=0
    _
  %s5 = ssub.s32 1, %s3
  %s6 = scalar_select 0, %s5, %s3
  // Predicated region
  $region2: #{spectral_conv1d.1} parent=0 // pred_check
    _
  $region3: #{spectral_conv1d.1} parent=0 // pred_check_branch
    %8 = sbr.rel (0) target = $region5
  $region4: #{spectral_conv1d.1} parent=0 // pred_region
    _
  $region5: #{spectral_conv1d.1} parent=0 // pred_fallthru
    _
  // Predicated region
  $region6: #{spectral_conv1d.1} parent=0 // pred_check
    _
  $region7: #{spectral_conv1d.1} parent=0 // pred_check_branch
    %10 = sbr.rel (0) target = $region9
  $region8: #{spectral_conv1d.1} parent=0 // pred_region
    _
  $region9: #{spectral_conv1d.1} parent=0 // pred_fallthru
    _
  %v11 = vld [vmem:[%s0] sm:$0xf]
  %v12 = vld [vmem:[%s0 + $0x4] sm:$0xf]
  %s13 = scalar_lea.vmem %s0, 8
  %v14 = vld [vmem:[%s13] sm:$0xf]
  %v15 = vld [vmem:[%s13 + $0x4] sm:$0xf]
  %v16 = vld [vmem:[%s1] sm:$0xf]
  %v17 = vld [vmem:[%s1 + $0x4] sm:$0xf]
  %v18 = vld [vmem:[%s1 + $0x8] sm:$0xf]
  %v19 = vld [vmem:[%s1 + $0xc] sm:$0xf]
  %s20 = scalar_lea.vmem %s1, 16
  %v21 = vld [vmem:[%s20] sm:$0xf]
  %v22 = vld [vmem:[%s20 + $0x4] sm:$0xf]
  %v23 = vld [vmem:[%s20 + $0x8] sm:$0xf]
  %v24 = vld [vmem:[%s20 + $0xc] sm:$0xf]
  %v25 = vperm.slane %v11, 0
  %v26 = vperm.slane %v12, 0
  %v27 = vmul.f32 %v25, %v16
  %v28 = vmul.f32 %v26, %v16
  %v29 = vperm.slane %v14, 0
  %v30 = vperm.slane %v15, 0
  %v31 = vmul.f32 %v29, %v21
  %v32 = vmul.f32 %v30, %v21
  %v33 = vsub.f32 %v27, %v31
  %v34 = vsub.f32 %v28, %v32
  %v35 = vmul.f32 %v25, %v21
  %v36 = vmul.f32 %v26, %v21
  %v37 = vmul.f32 %v29, %v16
  %v38 = vmul.f32 %v30, %v16
  %v39 = vadd.f32 %v35, %v37
  %v40 = vadd.f32 %v36, %v38
  %v41 = vperm.slane %v11, 1
  %v42 = vperm.slane %v12, 1
  %v43 = vmul.f32 %v41, %v17
  %v44 = vmul.f32 %v42, %v17
  %v45 = vperm.slane %v14, 1
  %v46 = vperm.slane %v15, 1
  %v47 = vmul.f32 %v45, %v22
  %v48 = vmul.f32 %v46, %v22
  %v49 = vsub.f32 %v43, %v47
  %v50 = vsub.f32 %v44, %v48
  %v51 = vmul.f32 %v41, %v22
  %v52 = vmul.f32 %v42, %v22
  %v53 = vmul.f32 %v45, %v17
  %v54 = vmul.f32 %v46, %v17
  %v55 = vadd.f32 %v51, %v53
  %v56 = vadd.f32 %v52, %v54
  %v57 = vadd.f32 %v33, %v49
  %v58 = vadd.f32 %v34, %v50
  %v59 = vadd.f32 %v39, %v55
  %v60 = vadd.f32 %v40, %v56
  %v61 = vperm.slane %v11, 2
  %v62 = vperm.slane %v12, 2
  %v63 = vmul.f32 %v61, %v18
  %v64 = vmul.f32 %v62, %v18
  %v65 = vperm.slane %v14, 2
  %v66 = vperm.slane %v15, 2
  %v67 = vmul.f32 %v65, %v23
  %v68 = vmul.f32 %v66, %v23
  %v69 = vsub.f32 %v63, %v67
  %v70 = vsub.f32 %v64, %v68
  %v71 = vmul.f32 %v61, %v23
  %v72 = vmul.f32 %v62, %v23
  %v73 = vmul.f32 %v65, %v18
  %v74 = vmul.f32 %v66, %v18
  %v75 = vadd.f32 %v71, %v73
  %v76 = vadd.f32 %v72, %v74
  %v77 = vadd.f32 %v57, %v69
  %v78 = vadd.f32 %v58, %v70
  %v79 = vadd.f32 %v59, %v75
  %v80 = vadd.f32 %v60, %v76
  %v81 = vperm.slane %v11, 3
  %v82 = vperm.slane %v12, 3
  %v83 = vmul.f32 %v81, %v19
  %v84 = vmul.f32 %v82, %v19
  %v85 = vperm.slane %v14, 3
  %v86 = vperm.slane %v15, 3
  %v87 = vmul.f32 %v85, %v24
  %v88 = vmul.f32 %v86, %v24
  %v89 = vsub.f32 %v83, %v87
  %v90 = vsub.f32 %v84, %v88
  %v91 = vmul.f32 %v81, %v24
  %v92 = vmul.f32 %v82, %v24
  %v93 = vmul.f32 %v85, %v19
  %v94 = vmul.f32 %v86, %v19
  %v95 = vadd.f32 %v91, %v93
  %v96 = vadd.f32 %v92, %v94
  %v97 = vadd.f32 %v77, %v89
  %v98 = vadd.f32 %v78, %v90
  %v99 = vadd.f32 %v79, %v95
  %v100 = vadd.f32 %v80, %v96
  %101 = vst [vmem:[%s2] sm:$0xf] %v97
  %102 = vst [vmem:[%s2 + $0x4] sm:$0xf] %v98
  %s103 = scalar_lea.vmem %s2, 8
  %104 = vst [vmem:[%s103] sm:$0xf] %v99
  %105 = vst [vmem:[%s103 + $0x4] sm:$0xf] %v100
  // Predicated region
  $region10: #{spectral_conv1d.1} parent=0 // pred_check
    _
  $region11: #{spectral_conv1d.1} parent=0 // pred_check_branch
    %107 = sbr.rel (0) target = $region13
  $region12: #{spectral_conv1d.1} parent=0 // pred_region
    _
  $region13: #{spectral_conv1d.1} parent=0 // pred_fallthru
    _
  // Predicated region
  $region14: #{spectral_conv1d.1} parent=0 // pred_check
    _
  $region15: #{spectral_conv1d.1} parent=0 // pred_check_branch
    %109 = sbr.rel (0) target = $region17
  $region16: #{spectral_conv1d.1} parent=0 // pred_region
    _
  $region17: #{spectral_conv1d.1} parent=0 // pred_fallthru
    _

</llo_original>
